<compile_context>
chip_gen: v5e
topology: v5e:2x2
jax: 0.10.0
libtpu: 0.0.40
codegen_flags: <defaults>
</compile_context>

<pallas_src>
from functools import partial, lru_cache

import jax
import jax.numpy as jnp
from jax.experimental import pallas as pl
from jax.experimental.pallas import tpu as pltpu

NUM_CLASSES = 10  # stand-in for cfg.MODEL.NUM_CLASSES

# ----------------------------------------------------------------------------
# Pallas kernels
# ----------------------------------------------------------------------------


def _gemm_kernel(x_ref, w_ref, s_ref, b_ref, o_ref, acc_ref, *, relu):
    """Tiled GEMM (bf16 x bf16 -> f32 acc) + folded-BN scale/bias (+ ReLU) epilogue."""
    @pl.when(pl.program_id(2) == 0)
    def _():
        acc_ref[...] = jnp.zeros_like(acc_ref)

    acc_ref[...] += jnp.dot(x_ref[...], w_ref[...],
                            preferred_element_type=jnp.float32)

    @pl.when(pl.program_id(2) == pl.num_programs(2) - 1)
    def _():
        y = acc_ref[...] * s_ref[...] + b_ref[...]
        if relu:
            y = jnp.maximum(y, 0.0)
        o_ref[...] = y.astype(o_ref.dtype)


def _gemm_res_kernel(x_ref, w_ref, s_ref, b_ref, r_ref, o_ref, acc_ref, *, relu):
    """Same as _gemm_kernel but with the residual shortcut fused into the epilogue."""
    @pl.when(pl.program_id(2) == 0)
    def _():
        acc_ref[...] = jnp.zeros_like(acc_ref)

    acc_ref[...] += jnp.dot(x_ref[...], w_ref[...],
                            preferred_element_type=jnp.float32)

    @pl.when(pl.program_id(2) == pl.num_programs(2) - 1)
    def _():
        y = acc_ref[...] * s_ref[...] + b_ref[...] + r_ref[...].astype(jnp.float32)
        if relu:
            y = jnp.maximum(y, 0.0)
        o_ref[...] = y.astype(o_ref.dtype)


def _max3_kernel(a_ref, b_ref, c_ref, o_ref):
    o_ref[...] = jnp.maximum(jnp.maximum(a_ref[...], b_ref[...]), c_ref[...])


def _avgpool_kernel(x_ref, o_ref, *, inv_s):
    # x block: (1, S, C) -> f32 mean over S
    s = jnp.sum(x_ref[...].astype(jnp.float32), axis=1, keepdims=True)
    o_ref[...] = s * inv_s


# ----------------------------------------------------------------------------
# Tiling helpers + cached pallas_call builders
# ----------------------------------------------------------------------------


def _round_up(x, m):
    return ((x + m - 1) // m) * m


def _pick_dim(d):
    """Pick (tile, padded) for a K or N dimension (lane / contraction axis)."""
    if d < 128:
        if d % 8 == 0:
            return d, d                      # full small dim (e.g. C=64)
        p = _round_up(d, 128)
        return p, p                          # e.g. num_classes=10 -> 128
    if d <= 512:
        p = _round_up(d, 128)
        return p, p                          # single K/N block -> weight stays resident
    return 256, _round_up(d, 256)            # 256-wide tiles for the 2x256 MXU


def _pick_m(M):
    if M >= 256:
        return 256, _round_up(M, 256)
    m = _round_up(M, 8)
    return m, m                              # tiny-M deep layers: no 128-padding waste


@lru_cache(maxsize=None)
def _build_gemm(Mp, Kp, Np, TM, TK, TN, relu, has_res, out_dtype):
    in_specs = [
        pl.BlockSpec((TM, TK), lambda i, j, k: (i, k)),
        pl.BlockSpec((TK, TN), lambda i, j, k: (k, j)),
        pl.BlockSpec((1, TN), lambda i, j, k: (0, j)),
        pl.BlockSpec((1, TN), lambda i, j, k: (0, j)),
    ]
    if has_res:
        in_specs.append(pl.BlockSpec((TM, TN), lambda i, j, k: (i, j)))
        kernel = partial(_gemm_res_kernel, relu=relu)
    else:
        kernel = partial(_gemm_kernel, relu=relu)
    fn = pl.pallas_call(
        kernel,
        out_shape=jax.ShapeDtypeStruct((Mp, Np), out_dtype),
        grid_spec=pltpu.PrefetchScalarGridSpec(
            num_scalar_prefetch=0,
            grid=(Mp // TM, Np // TN, Kp // TK),
            in_specs=in_specs,
            out_specs=pl.BlockSpec((TM, TN), lambda i, j, k: (i, j)),
            scratch_shapes=[pltpu.VMEM((TM, TN), jnp.float32)],
        ),
        compiler_params=pltpu.CompilerParams(
            dimension_semantics=("parallel", "parallel", "arbitrary")),
    )
    return jax.jit(fn)


@lru_cache(maxsize=None)
def _build_max3(Mp, C, TMe, dtype):
    fn = pl.pallas_call(
        _max3_kernel,
        out_shape=jax.ShapeDtypeStruct((Mp, C), dtype),
        grid_spec=pltpu.PrefetchScalarGridSpec(
            num_scalar_prefetch=0,
            grid=(Mp // TMe,),
            in_specs=[pl.BlockSpec((TMe, C), lambda i: (i, 0)) for _ in range(3)],
            out_specs=pl.BlockSpec((TMe, C), lambda i: (i, 0)),
        ),
        compiler_params=pltpu.CompilerParams(dimension_semantics=("parallel",)),
    )
    return jax.jit(fn)


@lru_cache(maxsize=None)
def _build_avgpool(B, S, C):
    kernel = partial(_avgpool_kernel, inv_s=1.0 / float(S))
    fn = pl.pallas_call(
        kernel,
        out_shape=jax.ShapeDtypeStruct((B, 1, C), jnp.float32),
        grid_spec=pltpu.PrefetchScalarGridSpec(
            num_scalar_prefetch=0,
            grid=(B,),
            in_specs=[pl.BlockSpec((1, S, C), lambda b: (b, 0, 0))],
            out_specs=pl.BlockSpec((1, 1, C), lambda b: (b, 0, 0)),
        ),
        compiler_params=pltpu.CompilerParams(dimension_semantics=("parallel",)),
    )
    return jax.jit(fn)


# ----------------------------------------------------------------------------
# Wrappers
# ----------------------------------------------------------------------------


def _im2col(x, ksize, stride, padding, Kp):
    """Build a (M, Kp) bf16 patch matrix (zero K-padding fused into the concat)."""
    B, T, H, W, C = x.shape
    kt, kh, kw = ksize
    st, sh, sw = stride
    pt, ph, pw = padding
    if (kt, kh, kw) == (1, 1, 1) and padding == (0, 0, 0):
        xs = x[:, ::st, ::sh, ::sw, :]
        _, To, Ho, Wo, _ = xs.shape
        K = C
        cols = [xs]
    else:
        xp = jnp.pad(x, ((0, 0), (pt, pt), (ph, ph), (pw, pw), (0, 0)))
        To = (T + 2 * pt - kt) // st + 1
        Ho = (H + 2 * ph - kh) // sh + 1
        Wo = (W + 2 * pw - kw) // sw + 1
        cols = []
        for dt in range(kt):
            for dh in range(kh):
                for dw in range(kw):
                    cols.append(xp[:, dt:dt + st * To:st,
                                   dh:dh + sh * Ho:sh,
                                   dw:dw + sw * Wo:sw, :])
        K = kt * kh * kw * C
    if Kp > K:
        cols.append(jnp.zeros((B, To, Ho, Wo, Kp - K), x.dtype))
    patches = cols[0] if len(cols) == 1 else jnp.concatenate(cols, axis=-1)
    return patches.reshape(B * To * Ho * Wo, Kp), (B, To, Ho, Wo)


def conv3d_bn_act(x, pc, stride, padding, relu, residual=None):
    """3D conv + folded BN + optional ReLU (+ optional fused residual add).

    x: (B,T,H,W,Cin) bf16;  residual (if given): (B,To,Ho,Wo,Cout) bf16."""
    patches, (B, To, Ho, Wo) = _im2col(x, pc["ksize"], stride, padding, pc["Kp"])
    M = B * To * Ho * Wo
    TM, Mp = _pick_m(M)
    if Mp > M:
        patches = jnp.pad(patches, ((0, Mp - M), (0, 0)))
    args = [patches, pc["w"], pc["s"], pc["b"]]
    if residual is not None:
        r = residual.reshape(M, pc["N"]).astype(jnp.bfloat16)
        if Mp > M or pc["Np"] > pc["N"]:
            r = jnp.pad(r, ((0, Mp - M), (0, pc["Np"] - pc["N"])))
        args.append(r)
    fn = _build_gemm(Mp, pc["Kp"], pc["Np"], TM, pc["TK"], pc["TN"],
                     bool(relu), residual is not None, jnp.bfloat16)
    y = fn(*args)
    return y[:M, :pc["N"]].reshape(B, To, Ho, Wo, pc["N"])


def dense(x2d, pc, relu=False):
    """Final FC: (M, K) @ (K, N) + bias, f32 output."""
    M, K = x2d.shape
    x2d = x2d.astype(jnp.bfloat16)
    if pc["Kp"] > K:
        x2d = jnp.pad(x2d, ((0, 0), (0, pc["Kp"] - K)))
    TM, Mp = _pick_m(M)
    if Mp > M:
        x2d = jnp.pad(x2d, ((0, Mp - M), (0, 0)))
    fn = _build_gemm(Mp, pc["Kp"], pc["Np"], TM, pc["TK"], pc["TN"],
                     bool(relu), False, jnp.float32)
    y = fn(x2d, pc["w"], pc["s"], pc["b"])
    return y[:M, :pc["N"]]


def _max3(a, b, c):
    shape = a.shape
    C = shape[-1]
    M = 1
    for d in shape[:-1]:
        M *= d
    a2, b2, c2 = (t.reshape(M, C) for t in (a, b, c))
    if M <= 4096:
        TMe = _round_up(M, 8)
    else:
        TMe = 2048
    Mp = _round_up(M, TMe)
    if Mp > M:
        padcfg = ((0, Mp - M), (0, 0))
        a2 = jnp.pad(a2, padcfg)
        b2 = jnp.pad(b2, padcfg)
        c2 = jnp.pad(c2, padcfg)
    y = _build_max3(Mp, C, TMe, a.dtype)(a2, b2, c2)
    return y[:M].reshape(shape)


def maxpool3d(x):
    """MaxPool3d(kernel_size=3, stride=2, padding=1), floor mode.  Separable max:
    pool along W, then H, then T, each with a tiled 3-way max kernel (no 27x stack)."""
    B, T, H, W, C = x.shape
    To = (T - 1) // 2 + 1
    Ho = (H - 1) // 2 + 1
    Wo = (W - 1) // 2 + 1
    xp = jnp.pad(x, ((0, 0), (1, 1), (1, 1), (1, 1), (0, 0)),
                 constant_values=-jnp.inf)
    # W axis
    y = _max3(xp[:, :, :, 0:2 * Wo - 1:2, :],
              xp[:, :, :, 1:2 * Wo:2, :],
              xp[:, :, :, 2:2 * Wo + 1:2, :])
    # H axis
    y = _max3(y[:, :, 0:2 * Ho - 1:2],
              y[:, :, 1:2 * Ho:2],
              y[:, :, 2:2 * Ho + 1:2])
    # T axis
    y = _max3(y[:, 0:2 * To - 1:2],
              y[:, 1:2 * To:2],
              y[:, 2:2 * To + 1:2])
    return y


def global_avgpool(x):
    """AdaptiveAvgPool3d((1,1,1)) + flatten -> (B, C) f32."""
    B, T, H, W, C = x.shape
    S = T * H * W
    out = _build_avgpool(B, S, C)(x.reshape(B, S, C))
    return out.reshape(B, C)


# ----------------------------------------------------------------------------
# Deterministic parameter construction (3D ResNet-50, widen_factor=1.0)
# ----------------------------------------------------------------------------


class KeyGen:
    def __init__(self, seed):
        self.key = jax.random.PRNGKey(seed)

    def __call__(self):
        self.key, sub = jax.random.split(self.key)
        return sub


def conv_init(key, cout, cin, kt, kh, kw):
    fan_in = cin * kt * kh * kw
    std = (2.0 / fan_in) ** 0.5
    return std * jax.random.normal(key, (cout, cin, kt, kh, kw), jnp.float32)


def bn_init(key, c, eps=1e-5):
    """Folded inference-mode BN -> (scale, bias)."""
    k1, k2, k3, k4 = jax.random.split(key, 4)
    gamma = 1.0 + 0.1 * jax.random.normal(k1, (c,), jnp.float32)
    beta = 0.1 * jax.random.normal(k2, (c,), jnp.float32)
    mean = 0.1 * jax.random.normal(k3, (c,), jnp.float32)
    var = 1.0 + 0.1 * jax.random.uniform(k4, (c,), jnp.float32)
    scale = gamma * jax.lax.rsqrt(var + eps)
    bias = beta - mean * scale
    return scale, bias


def prep_conv(w, bn):
    """Prepare a conv once: tap-major (K, Cout) bf16 weight matrix padded to tile
    multiples, plus padded f32 BN scale/bias."""
    cout, cin, kt, kh, kw = w.shape
    K = kt * kh * kw * cin
    wmat = jnp.transpose(w, (2, 3, 4, 1, 0)).reshape(K, cout)  # tap-major features
    TK, Kp = _pick_dim(K)
    TN, Np = _pick_dim(cout)
    wmat = jnp.pad(wmat, ((0, Kp - K), (0, Np - cout))).astype(jnp.bfloat16)
    scale, bias = bn
    s = jnp.pad(scale, (0, Np - cout)).reshape(1, Np).astype(jnp.float32)
    b = jnp.pad(bias, (0, Np - cout)).reshape(1, Np).astype(jnp.float32)
    return dict(w=wmat, s=s, b=b, K=K, N=cout, Kp=Kp, Np=Np, TK=TK, TN=TN,
                ksize=(kt, kh, kw))


def prep_dense(w, b):
    """Prepare the FC layer (PyTorch Linear layout w: (N, K))."""
    N, K = w.shape
    TK, Kp = _pick_dim(K)
    TN, Np = _pick_dim(N)
    wmat = jnp.pad(w.T, ((0, Kp - K), (0, Np - N))).astype(jnp.bfloat16)
    s = jnp.pad(jnp.ones((N,), jnp.float32), (0, Np - N)).reshape(1, Np)
    bb = jnp.pad(b, (0, Np - N)).reshape(1, Np).astype(jnp.float32)
    return dict(w=wmat, s=s, b=bb, K=K, N=N, Kp=Kp, Np=Np, TK=TK, TN=TN)


# (name, planes, n_blocks, first-block stride)  -- ResNet-50: [3, 4, 6, 3]
LAYER_CFG = [("layer1", 64, 3, 1),
             ("layer2", 128, 4, 2),
             ("layer3", 256, 6, 2),
             ("layer4", 512, 3, 2)]
EXPANSION = 4


def build_params(seed, num_classes):
    kg = KeyGen(seed)
    params = {}
    # conv1: Conv3d(3, 64, k=7, stride=(1,2,2), pad=3, bias=False) + BN
    params["stem"] = prep_conv(conv_init(kg(), 64, 3, 7, 7, 7), bn_init(kg(), 64))
    in_planes = 64
    for name, planes, nblocks, stride in LAYER_CFG:
        blocks = []
        for bi in range(nblocks):
            s = stride if bi == 0 else 1
            needs_ds = (s != 1) or (in_planes != planes * EXPANSION)
            bp = {}
            bp["c1"] = prep_conv(conv_init(kg(), planes, in_planes, 1, 1, 1),
                                 bn_init(kg(), planes))
            bp["c2"] = prep_conv(conv_init(kg(), planes, planes, 3, 3, 3),
                                 bn_init(kg(), planes))
            bp["c3"] = prep_conv(conv_init(kg(), planes * EXPANSION, planes, 1, 1, 1),
                                 bn_init(kg(), planes * EXPANSION))
            if needs_ds:  # shortcut_type='B' -> 1x1x1 conv + BN
                bp["ds"] = prep_conv(conv_init(kg(), planes * EXPANSION, in_planes, 1, 1, 1),
                                     bn_init(kg(), planes * EXPANSION))
            blocks.append(bp)
            in_planes = planes * EXPANSION
        params[name] = blocks
    fc_w = 0.02 * jax.random.normal(kg(), (num_classes, 512 * EXPANSION), jnp.float32)
    fc_b = 0.01 * jax.random.normal(kg(), (num_classes,), jnp.float32)
    params["fc"] = prep_dense(fc_w, fc_b)
    return params


# ----------------------------------------------------------------------------
# Forward pass
# ----------------------------------------------------------------------------


def bottleneck(x, p, stride):
    out = conv3d_bn_act(x, p["c1"], (1, 1, 1), (0, 0, 0), relu=True)
    out = conv3d_bn_act(out, p["c2"], (stride, stride, stride), (1, 1, 1), relu=True)
    if "ds" in p:
        short = conv3d_bn_act(x, p["ds"], (stride, stride, stride), (0, 0, 0), relu=False)
    else:
        short = x
    # residual add + ReLU fused into the conv3 GEMM epilogue
    return conv3d_bn_act(out, p["c3"], (1, 1, 1), (0, 0, 0), relu=True, residual=short)


def resnet50_forward(params, x_ncdhw):
    # accept PyTorch NCDHW, convert to channels-last bf16 NDHWC
    x = jnp.transpose(x_ncdhw, (0, 2, 3, 4, 1)).astype(jnp.bfloat16)
    x = conv3d_bn_act(x, params["stem"], stride=(1, 2, 2), padding=(3, 3, 3), relu=True)
    x = maxpool3d(x)  # no_max_pool=False
    for name, _, _, stride in LAYER_CFG:
        for bi, bp in enumerate(params[name]):
            x = bottleneck(x, bp, stride if bi == 0 else 1)
    pooled = global_avgpool(x)                 # (B, 2048) f32
    logits = dense(pooled, params["fc"])       # (B, num_classes) f32
    return logits


# ----------------------------------------------------------------------------
# Main
# ----------------------------------------------------------------------------

if __name__ == "__main__":
    key = jax.random.PRNGKey(0)
    k_x, _ = jax.random.split(key)
    # small clip: batch=2, 3 channels, 8 frames, 32x32 spatial (NCDHW like PyTorch)
    x = jax.random.normal(k_x, (2, 3, 8, 32, 32), jnp.float32)

    params = build_params(seed=0, num_classes=NUM_CLASSES)

    logits = resnet50_forward(params, x)
    logits = jax.block_until_ready(logits)

    assert logits.shape == (2, NUM_CLASSES), logits.shape
    assert bool(jnp.all(jnp.isfinite(logits)))
    print("KERNEL_OK")
</pallas_src>

<mosaic_0001>
module attributes {stable_mosaic.version = 11 : i64} {
  func.func @_gemm_kernel(%arg0: i32, %arg1: i32, %arg2: i32, %arg3: memref<256x256xbf16, #tpu.memory_space<vmem>>, %arg4: memref<256x64xbf16, #tpu.memory_space<vmem>>, %arg5: memref<1x64xf32, #tpu.memory_space<vmem>>, %arg6: memref<1x64xf32, #tpu.memory_space<vmem>>, %arg7: memref<256x64xbf16, #tpu.memory_space<vmem>>, %arg8: memref<256x64xf32, #tpu.memory_space<vmem>>) attributes {dimension_semantics = [#tpu.dimension_semantics<parallel>, #tpu.dimension_semantics<parallel>, #tpu.dimension_semantics<arbitrary>], iteration_bounds = array<i64: 16, 1, 5>, scalar_prefetch = 0 : i64, scratch_operands = 1 : i64, tpu.core_type = #tpu.core_type<tc>, window_params = [{transform_indices = @transform_0, window_bounds = array<i64: 256, 256>}, {transform_indices = @transform_1, window_bounds = array<i64: 256, 64>}, {transform_indices = @transform_2, window_bounds = array<i64: 1, 64>}, {transform_indices = @transform_3, window_bounds = array<i64: 1, 64>}, {transform_indices = @transform_4, window_bounds = array<i64: 256, 64>}]} {
    %c0_i32 = arith.constant 0 : i32
    %0 = arith.cmpi eq, %arg2, %c0_i32 : i32
    %1 = arith.extui %0 : i1 to i32
    %c0_i32_0 = arith.constant 0 : i32
    %2 = arith.cmpi ne, %1, %c0_i32_0 : i32
    scf.if %2 {
      %cst_9 = arith.constant 0.000000e+00 : f32
      %12 = vector.broadcast %cst_9 : f32 to vector<256x64xf32>
      %c0_10 = arith.constant 0 : index
      %c0_11 = arith.constant 0 : index
      %13 = vector.load %arg8[%c0_10, %c0_11] : memref<256x64xf32, #tpu.memory_space<vmem>>, vector<256x64xf32>
      tpu.vector_store %arg8[%c0_10, %c0_11], %12 {strides = array<i32>} : memref<256x64xf32, #tpu.memory_space<vmem>>, vector<256x64xf32>,
    } else {
    }
    %c0 = arith.constant 0 : index
    %c0_1 = arith.constant 0 : index
    %3 = vector.load %arg8[%c0, %c0_1] : memref<256x64xf32, #tpu.memory_space<vmem>>, vector<256x64xf32>
    %c0_2 = arith.constant 0 : index
    %c0_3 = arith.constant 0 : index
    %4 = vector.load %arg3[%c0_2, %c0_3] : memref<256x256xbf16, #tpu.memory_space<vmem>>, vector<256x256xbf16>
    %c0_4 = arith.constant 0 : index
    %c0_5 = arith.constant 0 : index
    %5 = vector.load %arg4[%c0_4, %c0_5] : memref<256x64xbf16, #tpu.memory_space<vmem>>, vector<256x64xbf16>
    %cst = arith.constant dense<0.000000e+00> : vector<256x64xf32>
    %6 = tpu.matmul %4, %5, %cst {dimension_numbers = #tpu.dot_dimension_numbers<[1], [0], [0], [1], [0, 0, 1, 1], [], []>} : vector<256x256xbf16>, vector<256x64xbf16>, vector<256x64xf32> -> vector<256x64xf32>
    %7 = arith.addf %3, %6 : vector<256x64xf32>
    %c0_6 = arith.constant 0 : index
    %c0_7 = arith.constant 0 : index
    %8 = vector.load %arg8[%c0_6, %c0_7] : memref<256x64xf32, #tpu.memory_space<vmem>>, vector<256x64xf32>
    tpu.vector_store %arg8[%c0_6, %c0_7], %7 {strides = array<i32>} : memref<256x64xf32, #tpu.memory_space<vmem>>, vector<256x64xf32>,
    %c4_i32 = arith.constant 4 : i32
    %9 = arith.cmpi eq, %arg2, %c4_i32 : i32
    %10 = arith.extui %9 : i1 to i32
    %c0_i32_8 = arith.constant 0 : i32
    %11 = arith.cmpi ne, %10, %c0_i32_8 : i32
    scf.if %11 {
      %c0_9 = arith.constant 0 : index
      %c0_10 = arith.constant 0 : index
      %12 = vector.load %arg8[%c0_9, %c0_10] : memref<256x64xf32, #tpu.memory_space<vmem>>, vector<256x64xf32>
      %c0_11 = arith.constant 0 : index
      %c0_12 = arith.constant 0 : index
      %13 = vector.load %arg5[%c0_11, %c0_12] : memref<1x64xf32, #tpu.memory_space<vmem>>, vector<1x64xf32>
      %14 = vector.broadcast %13 : vector<1x64xf32> to vector<256x64xf32>
      %15 = arith.mulf %12, %14 : vector<256x64xf32>
      %c0_13 = arith.constant 0 : index
      %c0_14 = arith.constant 0 : index
      %16 = vector.load %arg6[%c0_13, %c0_14] : memref<1x64xf32, #tpu.memory_space<vmem>>, vector<1x64xf32>
      %17 = vector.broadcast %16 : vector<1x64xf32> to vector<256x64xf32>
      %18 = arith.addf %15, %17 : vector<256x64xf32>
      %cst_15 = arith.constant 0.000000e+00 : f32
      %19 = vector.broadcast %cst_15 : f32 to vector<256x64xf32>
      %20 = arith.maximumf %18, %19 : vector<256x64xf32>
      %21 = arith.truncf %20 : vector<256x64xf32> to vector<256x64xbf16>
      %c0_16 = arith.constant 0 : index
      %c0_17 = arith.constant 0 : index
      %22 = vector.load %arg7[%c0_16, %c0_17] : memref<256x64xbf16, #tpu.memory_space<vmem>>, vector<256x64xbf16>
      tpu.vector_store %arg7[%c0_16, %c0_17], %21 {strides = array<i32>} : memref<256x64xbf16, #tpu.memory_space<vmem>>, vector<256x64xbf16>,
    } else {
    }
    return
  }
  func.func @transform_0(%arg0: i32, %arg1: i32, %arg2: i32) -> (i32, i32) {
    %c0_i32 = arith.constant 0 : i32
    return %arg0, %arg2 : i32, i32
  }
  func.func @transform_1(%arg0: i32, %arg1: i32, %arg2: i32) -> (i32, i32) {
    %c0_i32 = arith.constant 0 : i32
    return %arg2, %arg1 : i32, i32
  }
  func.func @transform_2(%arg0: i32, %arg1: i32, %arg2: i32) -> (i32, i32) {
    %c0_i32 = arith.constant 0 : i32
    %c0_i32_0 = arith.constant 0 : i32
    return %c0_i32, %arg1 : i32, i32
  }
  func.func @transform_3(%arg0: i32, %arg1: i32, %arg2: i32) -> (i32, i32) {
    %c0_i32 = arith.constant 0 : i32
    %c0_i32_0 = arith.constant 0 : i32
    return %c0_i32, %arg1 : i32, i32
  }
  func.func @transform_4(%arg0: i32, %arg1: i32, %arg2: i32) -> (i32, i32) {
    %c0_i32 = arith.constant 0 : i32
    return %arg0, %arg1 : i32, i32
  }
}

</mosaic_0001>

<llo_original>
// kernel: tpu_custom_call.1
$region0: #{tpu_custom_call.1}
  #allocation0 [shape = 'u32[]', space=smem, size = 0x4, offset = 0x4, fixed_abs, tag = 'smem constant byte address 0x4 - core index']
  #allocation1 [shape = 'u32[72,128]{1,0:T(1,128)}', space=vmem, size = 0x9000, scoped, tag = 'internal scratch']
  #allocation2 [shape = 'f32[256,64]{1,0:T(8,128)}', space=vmem, size = 0x20000, scoped, tag = 'scratch operand']
  %s0 = inlined_call_operand.hbm [shape: bf16[4096,1280], index: 0, kind: input, shape index: {}]
  %s1 = inlined_call_operand.vmem [shape: bf16[1280,64], index: 1, kind: input, shape index: {}]
  %s2 = inlined_call_operand.hbm [shape: f32[1,64], index: 2, kind: input, shape index: {}]
  %s3 = inlined_call_operand.hbm [shape: f32[1,64], index: 3, kind: input, shape index: {}]
  %s4 = inlined_call_operand.vmem [shape: bf16[4096,64], index: 4, kind: output, shape index: {}]
  %s5 = sld [smem:[#allocation0]]
  $region69: #{tpu_custom_call.1} parent=0
    _
  %s7 = ssub.s32 1, %s5
  %s8 = scalar_select 0, %s7, %s5
  $region1: #{tpu_custom_call.1} parent=0
    #allocation3 [shape = 'u8[262144]{0}', space=vmem, size = 0x40000, scoped, tag = 'input window, operand 0']
    #allocation4 [shape = 's32[2]{0}', space=sflag, size = 0x8, scoped, tag = 'scoped memory for tpu_custom_call.1']
    #allocation5 [shape = 'u8[512]{0}', space=vmem, size = 0x400, scoped, tag = 'input window, operand 2, single buffered']
    #allocation6 [shape = 's32[1]{0}', space=sflag, size = 0x4, scoped, tag = 'scoped memory for tpu_custom_call.1']
    #allocation7 [shape = 'u8[512]{0}', space=vmem, size = 0x400, scoped, tag = 'input window, operand 3, single buffered']
    %9 = vsyncpa [#allocation4], 0
    %s10 = scalar_lea.sflag [#allocation4], 1
    %11 = vsyncpa %s10, 0
    %12 = vsyncpa [#allocation6], 0
    loop: start=0, step=1, limit=82
    $region2: #{tpu_custom_call.1} parent=1 // loop_pre_header
      _
    $region3: #{tpu_custom_call.1} parent=1 // loop_header
      %s14 = sphi 0, %s18
      %p15 = scmp.ge.s32.totalorder %s14, 82
      %s21 = sphi 0, %s40
      %s22 = sphi 0, %s36
      %s23 = sphi 0, %s32
      %s24 = sphi 0, %s21
      %s25 = sphi 0, %s22
      %s26 = sphi 0, %s23
      %s27 = sphi 0, %s24
      %s28 = sphi 0, %s25
      %s29 = sphi 0, %s26
      %s45 = sphi 0, %s47
      %s48 = sphi 0, %s45
      %s49 = sphi 0, %s48
      %s65 = sphi 0, %s49
      %s73 = sphi 0, %s75
      %s76 = sphi 0, %s73
      %s77 = sphi 0, %s76
      %s93 = sphi 0, %s77
      %s99 = sphi 0, %s101
      %s102 = sphi 0, %s99
      %s103 = sphi 0, %s102
      %s119 = sphi 0, %s103
      %s125 = sphi 0, %s127
      %s128 = sphi 0, %s125
      %s129 = sphi 0, %s128
      %s145 = sphi 0, %s129
      %s153 = sphi 0, %s155
      %s156 = sphi 0, %s153
      %s157 = sphi 0, %s156
      %s173 = sphi 0, %s157
    $region4: #{tpu_custom_call.1} parent=1 // loop_header_branch
      %17 = sbr.rel (%p15) target = $region8
    $region5: #{tpu_custom_call.1} parent=1 // loop_body
      %s19 = ssub.s32 %s14, 1
      %s20 = ssub.s32 %s14, 2
      %s30 = sadd.s32 1, %s23
      %p31 = scmp.ge.s32.totalorder %s30, 5
      %s32 = scalar_select %p31, 0, %s30
      %s33 = sadd.s32 1, %s22
      %s34 = scalar_select %p31, %s33, %s22
      %p35 = scmp.ge.s32.totalorder %s34, 1
      %s36 = scalar_select %p35, 0, %s34
      %s37 = sadd.s32 1, %s21
      %s38 = scalar_select %p35, %s37, %s21
      %p39 = scmp.ge.s32.totalorder %s38, 16
      %s40 = scalar_select %p39, 0, %s38
      %s41 = ssub.s32 %s21, %s40
      %s42 = ssub.s32 %s23, %s32
      %s43 = sor.u32 %s41, %s42
      %p44 = scmp.eq.s32.totalorder %s43, 0
      %s46 = sadd.s32 %s45, 1
      %s47 = scalar_select %p44, %s45, %s46
      %p50 = pneg %p44
      %p51 = scmp.eq.s32.totalorder %s14, 79
      %p52 = por %p50, %p51
      %p53 = scmp.ne.s32.totalorder %s45, %s48
      %p54 = scmp.eq.s32.totalorder %s14, 0
      %p55 = por %p53, %p54
      %p56 = scmp.ne.s32.totalorder %s45, %s48
      %p57 = scmp.eq.s32.totalorder %s19, 79
      %p58 = por %p56, %p57
      %p59 = scmp.ne.s32.totalorder %s48, %s49
      %p60 = scmp.eq.s32.totalorder %s19, 0
      %p61 = por %p59, %p60
      %p62 = scmp.ne.s32.totalorder %s48, %s49
      %p63 = scmp.eq.s32.totalorder %s20, 79
      %p64 = por %p62, %p63
      %p66 = scmp.ne.s32.totalorder %s49, %s65
      %p67 = scmp.eq.s32.totalorder %s20, 0
      %p68 = por %p66, %p67
      %s69 = ssub.s32 %s23, %s32
      %s70 = ssub.s32 %s22, %s36
      %s71 = sor.u32 %s69, %s70
      %p72 = scmp.eq.s32.totalorder %s71, 0
      %s74 = sadd.s32 %s73, 1
      %s75 = scalar_select %p72, %s73, %s74
      %p78 = pneg %p72
      %p79 = scmp.eq.s32.totalorder %s14, 79
      %p80 = por %p78, %p79
      %p81 = scmp.ne.s32.totalorder %s73, %s76
      %p82 = scmp.eq.s32.totalorder %s14, 0
      %p83 = por %p81, %p82
      %p84 = scmp.ne.s32.totalorder %s73, %s76
      %p85 = scmp.eq.s32.totalorder %s19, 79
      %p86 = por %p84, %p85
      %p87 = scmp.ne.s32.totalorder %s76, %s77
      %p88 = scmp.eq.s32.totalorder %s19, 0
      %p89 = por %p87, %p88
      %p90 = scmp.ne.s32.totalorder %s76, %s77
      %p91 = scmp.eq.s32.totalorder %s20, 79
      %p92 = por %p90, %p91
      %p94 = scmp.ne.s32.totalorder %s77, %s93
      %p95 = scmp.eq.s32.totalorder %s20, 0
      %p96 = por %p94, %p95
      %s97 = ssub.s32 %s22, %s36
      %p98 = scmp.eq.s32.totalorder %s97, 0
      %s100 = sadd.s32 %s99, 1
      %s101 = scalar_select %p98, %s99, %s100
      %p104 = pneg %p98
      %p105 = scmp.eq.s32.totalorder %s14, 79
      %p106 = por %p104, %p105
      %p107 = scmp.ne.s32.totalorder %s99, %s102
      %p108 = scmp.eq.s32.totalorder %s14, 0
      %p109 = por %p107, %p108
      %p110 = scmp.ne.s32.totalorder %s99, %s102
      %p111 = scmp.eq.s32.totalorder %s19, 79
      %p112 = por %p110, %p111
      %p113 = scmp.ne.s32.totalorder %s102, %s103
      %p114 = scmp.eq.s32.totalorder %s19, 0
      %p115 = por %p113, %p114
      %p116 = scmp.ne.s32.totalorder %s102, %s103
      %p117 = scmp.eq.s32.totalorder %s20, 79
      %p118 = por %p116, %p117
      %p120 = scmp.ne.s32.totalorder %s103, %s119
      %p121 = scmp.eq.s32.totalorder %s20, 0
      %p122 = por %p120, %p121
      %s123 = ssub.s32 %s22, %s36
      %p124 = scmp.eq.s32.totalorder %s123, 0
      %s126 = sadd.s32 %s125, 1
      %s127 = scalar_select %p124, %s125, %s126
      %p130 = pneg %p124
      %p131 = scmp.eq.s32.totalorder %s14, 79
      %p132 = por %p130, %p131
      %p133 = scmp.ne.s32.totalorder %s125, %s128
      %p134 = scmp.eq.s32.totalorder %s14, 0
      %p135 = por %p133, %p134
      %p136 = scmp.ne.s32.totalorder %s125, %s128
      %p137 = scmp.eq.s32.totalorder %s19, 79
      %p138 = por %p136, %p137
      %p139 = scmp.ne.s32.totalorder %s128, %s129
      %p140 = scmp.eq.s32.totalorder %s19, 0
      %p141 = por %p139, %p140
      %p142 = scmp.ne.s32.totalorder %s128, %s129
      %p143 = scmp.eq.s32.totalorder %s20, 79
      %p144 = por %p142, %p143
      %p146 = scmp.ne.s32.totalorder %s129, %s145
      %p147 = scmp.eq.s32.totalorder %s20, 0
      %p148 = por %p146, %p147
      %s149 = ssub.s32 %s21, %s40
      %s150 = ssub.s32 %s22, %s36
      %s151 = sor.u32 %s149, %s150
      %p152 = scmp.eq.s32.totalorder %s151, 0
      %s154 = sadd.s32 %s153, 1
      %s155 = scalar_select %p152, %s153, %s154
      %p158 = pneg %p152
      %p159 = scmp.eq.s32.totalorder %s14, 79
      %p160 = por %p158, %p159
      %p161 = scmp.ne.s32.totalorder %s153, %s156
      %p162 = scmp.eq.s32.totalorder %s14, 0
      %p163 = por %p161, %p162
      %p164 = scmp.ne.s32.totalorder %s153, %s156
      %p165 = scmp.eq.s32.totalorder %s19, 79
      %p166 = por %p164, %p165
      %p167 = scmp.ne.s32.totalorder %s156, %s157
      %p168 = scmp.eq.s32.totalorder %s19, 0
      %p169 = por %p167, %p168
      %p170 = scmp.ne.s32.totalorder %s156, %s157
      %p171 = scmp.eq.s32.totalorder %s20, 79
      %p172 = por %p170, %p171
      %p174 = scmp.ne.s32.totalorder %s157, %s173
      %p175 = scmp.eq.s32.totalorder %s20, 0
      %p176 = por %p174, %p175
      %p177 = scmp.le.s32.totalorder 1, %s14
      %p178 = scmp.lt.s32.totalorder %s14, 81
      %p179 = pnand %p177, %p178
      %p180 = pneg %p179
      // Predicated region
      $region9: #{tpu_custom_call.1} parent=5 // pred_check
        _
      $region10: #{tpu_custom_call.1} parent=5 // pred_check_branch
        %182 = sbr.rel (%p179) target = $region12
      $region11: #{tpu_custom_call.1} parent=5 // pred_region
        %s183 = ssub.s32 %s14, 1
        // Predicated region
        $region13: #{tpu_custom_call.1} parent=11 // pred_check
          %p184 = pneg %p115
        $region14: #{tpu_custom_call.1} parent=11 // pred_check_branch
          %186 = sbr.rel (%p184) target = $region16
        $region15: #{tpu_custom_call.1} parent=11 // pred_region
          %188 = vsyncadd [#allocation6], 0
          %s189 = scalar_lea.hbm %s2, %s25
          %s191 = sshll.u32 %s189, 4
          %s192 = int_to_ptr.hbm [resolvable:$true] %s191
          %s193 = sshll.u32 [#allocation5], 4
          %s194 = int_to_ptr.vmem [resolvable:$true] %s193
          %196 = dma.hbm_to_vmem [thread:$0]  %s192, 16, %s194, [#allocation6]
        $region16: #{tpu_custom_call.1} parent=11 // pred_fallthru
          _
        // Predicated region
        $region17: #{tpu_custom_call.1} parent=11 // pred_check
          %p197 = pneg %p141
        $region18: #{tpu_custom_call.1} parent=11 // pred_check_branch
          %199 = sbr.rel (%p197) target = $region20
        $region19: #{tpu_custom_call.1} parent=11 // pred_region
          %201 = vsyncadd [#allocation6], 0
          %s202 = scalar_lea.hbm %s3, %s25
          %s204 = sshll.u32 %s202, 4
          %s205 = int_to_ptr.hbm [resolvable:$true] %s204
          %s206 = sshll.u32 [#allocation7], 4
          %s207 = int_to_ptr.vmem [resolvable:$true] %s206
          %209 = dma.hbm_to_vmem [thread:$0]  %s205, 16, %s207, [#allocation6]
        $region20: #{tpu_custom_call.1} parent=11 // pred_fallthru
          _
      $region12: #{tpu_custom_call.1} parent=5 // pred_fallthru
        _
      %p210 = scmp.lt.s32.totalorder %s14, 80
      // Predicated region
      $region21: #{tpu_custom_call.1} parent=5 // pred_check
        %p211 = pneg %p210
      $region22: #{tpu_custom_call.1} parent=5 // pred_check_branch
        %213 = sbr.rel (%p211) target = $region24
      $region23: #{tpu_custom_call.1} parent=5 // pred_region
        // Predicated region
        $region25: #{tpu_custom_call.1} parent=23 // pred_check
          %p214 = pneg %p55
        $region26: #{tpu_custom_call.1} parent=23 // pred_check_branch
          %216 = sbr.rel (%p214) target = $region28
        $region27: #{tpu_custom_call.1} parent=23 // pred_region
          %s217 = sand.u32 %s45, 1
          %s218 = scalar_lea.sflag [#allocation4], %s217
          %s219 = sand.u32 %s45, 1
          %s220 = smul.addr %s219, 256
          %s221 = scalar_lea.vmem [#allocation3], %s220
          %s222 = smul.u32 32, %s21
          %s223 = smul.u32 2, %s23
          %225 = vsyncadd %s218, 0
          %s226 = smul.addr %s222, 10
          %s227 = sadd.s32 %s223, %s226
          %s228 = smul.addr %s227, 4
          %s229 = scalar_lea.hbm %s0, %s228
          %s230 = sshll.u32 %s229, 4
          %s231 = int_to_ptr.hbm [resolvable:$true] %s230
          %s232 = sshll.u32 %s221, 4
          %s233 = int_to_ptr.vmem [resolvable:$true] %s232
          %238 = dma.hbm_to_vmem [thread:$0]  %s231, 4096, %s233, %s218, 640, 128, 8
        $region28: #{tpu_custom_call.1} parent=23 // pred_fallthru
          _
        // Predicated region
        $region29: #{tpu_custom_call.1} parent=23 // pred_check
          %p239 = pneg %p83
        $region30: #{tpu_custom_call.1} parent=23 // pred_check_branch
          %241 = sbr.rel (%p239) target = $region32
        $region31: #{tpu_custom_call.1} parent=23 // pred_region
          %s242 = smul.u32 32, %s23
          %p243 = scmp.lt.s32.totalorder %s242, 159
          %s244 = scalar_select %p243, %s242, 159
          %p245 = scmp.lt.s32.totalorder %s22, 0
          %s246 = scalar_select %p245, %s22, 0
          %s247 = sadd.s32 %s246, %s244
          %s248 = smul.addr %s247, 4
          %s249 = scalar_lea.vmem %s1, %s248
          %s250 = smul.u32 32, %s23
        $region32: #{tpu_custom_call.1} parent=23 // pred_fallthru
          _
      $region24: #{tpu_custom_call.1} parent=5 // pred_fallthru
        _
      %p251 = scmp.le.s32.totalorder 1, %s14
      %p252 = scmp.lt.s32.totalorder %s14, 81
      %p253 = pnand %p251, %p252
      %p254 = pneg %p253
      // Predicated region
      $region33: #{tpu_custom_call.1} parent=5 // pred_check
        _
      $region34: #{tpu_custom_call.1} parent=5 // pred_check_branch
        %256 = sbr.rel (%p253) target = $region36
      $region35: #{tpu_custom_call.1} parent=5 // pred_region
        %s257 = ssub.s32 %s14, 1
        %s258 = sand.u32 %s48, 1
        %s259 = scalar_lea.sflag [#allocation4], %s258
        %s260 = sand.u32 %s48, 1
        %s261 = smul.addr %s260, 256
        %s262 = scalar_lea.vmem [#allocation3], %s261
        // Predicated region
        $region37: #{tpu_custom_call.1} parent=35 // pred_check
          %p263 = pneg %p61
        $region38: #{tpu_custom_call.1} parent=35 // pred_check_branch
          %265 = sbr.rel (%p263) target = $region40
        $region39: #{tpu_custom_call.1} parent=35 // pred_region
          %267 = dma.done %s259, 4096
        $region40: #{tpu_custom_call.1} parent=35 // pred_fallthru
          _
        // Predicated region
        $region41: #{tpu_custom_call.1} parent=35 // pred_check
          %p268 = pneg %p115
        $region42: #{tpu_custom_call.1} parent=35 // pred_check_branch
          %270 = sbr.rel (%p268) target = $region44
        $region43: #{tpu_custom_call.1} parent=35 // pred_region
          %272 = dma.done [#allocation6], 16
        $region44: #{tpu_custom_call.1} parent=35 // pred_fallthru
          _
        // Predicated region
        $region45: #{tpu_custom_call.1} parent=35 // pred_check
          %p273 = pneg %p141
        $region46: #{tpu_custom_call.1} parent=35 // pred_check_branch
          %275 = sbr.rel (%p273) target = $region48
        $region47: #{tpu_custom_call.1} parent=35 // pred_region
          %277 = dma.done [#allocation6], 16
        $region48: #{tpu_custom_call.1} parent=35 // pred_fallthru
          _
        %s278 = sand.u32 %s48, 1
        %s279 = scalar_lea.sflag [#allocation4], %s278
        %s280 = sand.u32 %s48, 1
        %s281 = smul.addr %s280, 256
        %s282 = scalar_lea.vmem [#allocation3], %s281
        %p283 = pneg %p61
        %p284 = pneg %p58
        %s285 = smul.u32 32, %s26
        %p286 = scmp.lt.s32.totalorder %s285, 159
        %s287 = scalar_select %p286, %s285, 159
        %p288 = scmp.lt.s32.totalorder %s25, 0
        %s289 = scalar_select %p288, %s25, 0
        %s290 = sadd.s32 %s289, %s287
        %s291 = smul.addr %s290, 4
        %s292 = scalar_lea.vmem %s1, %s291
        %p293 = pneg %p89
        %p294 = pneg %p86
        %p295 = pneg %p115
        %p296 = pneg %p112
        %p297 = pneg %p141
        %p298 = pneg %p138
        %p299 = pneg %p169
        %p300 = pneg %p166
        %s301 = smul.u32 32, %s24
        %p302 = scmp.lt.s32.totalorder %s301, 511
        %s303 = scalar_select %p302, %s301, 511
        %p304 = scmp.lt.s32.totalorder %s25, 0
        %s305 = scalar_select %p304, %s25, 0
        %s306 = sadd.s32 %s305, %s303
        %s307 = smul.addr %s306, 4
        %s308 = scalar_lea.vmem %s4, %s307
        %s309 = smul.u32 32, %s24
        %s310 = smul.u32 2, %s26
        %s311 = smul.u32 32, %s26
        %p312 = scmp.lt.s32.totalorder %s311, 159
        %s313 = scalar_select %p312, %s311, 159
        %p314 = scmp.lt.s32.totalorder %s25, 0
        %s315 = scalar_select %p314, %s25, 0
        %s316 = sadd.s32 %s315, %s313
        %s317 = smul.addr %s316, 4
        %s318 = scalar_lea.vmem %s1, %s317
        %s319 = smul.u32 32, %s26
        %s320 = smul.u32 32, %s24
        %p321 = scmp.lt.s32.totalorder %s320, 511
        %s322 = scalar_select %p321, %s320, 511
        %p323 = scmp.lt.s32.totalorder %s25, 0
        %s324 = scalar_select %p323, %s25, 0
        %s325 = sadd.s32 %s324, %s322
        %s326 = smul.addr %s325, 4
        %s327 = scalar_lea.vmem %s4, %s326
        %s328 = smul.u32 32, %s24
        %p329 = scmp.eq.s32.totalorder %s26, 0
        // Predicated region
        $region49: #{tpu_custom_call.1} parent=35 // pred_check
          %p330 = pneg %p329
        $region50: #{tpu_custom_call.1} parent=35 // pred_check_branch
          %332 = sbr.rel (%p330) target = $region52
        $region51: #{tpu_custom_call.1} parent=35 // pred_region
          %vm333 = vcmask 523264
          %334 = vst.msk [vmem:[#allocation2] sm:$0xff] %vm333, 0.0
          %335 = vst.msk [vmem:[#allocation2 + $0x8] sm:$0xff] %vm333, 0.0
          %336 = vst.msk [vmem:[#allocation2 + $0x10] sm:$0xff] %vm333, 0.0
          %337 = vst.msk [vmem:[#allocation2 + $0x18] sm:$0xff] %vm333, 0.0
          %338 = vst.msk [vmem:[#allocation2 + $0x20] sm:$0xff] %vm333, 0.0
          %339 = vst.msk [vmem:[#allocation2 + $0x28] sm:$0xff] %vm333, 0.0
          %340 = vst.msk [vmem:[#allocation2 + $0x30] sm:$0xff] %vm333, 0.0
          %341 = vst.msk [vmem:[#allocation2 + $0x38] sm:$0xff] %vm333, 0.0
          %342 = vst.msk [vmem:[#allocation2 + $0x40] sm:$0xff] %vm333, 0.0
          %343 = vst.msk [vmem:[#allocation2 + $0x48] sm:$0xff] %vm333, 0.0
          %344 = vst.msk [vmem:[#allocation2 + $0x50] sm:$0xff] %vm333, 0.0
          %345 = vst.msk [vmem:[#allocation2 + $0x58] sm:$0xff] %vm333, 0.0
          %346 = vst.msk [vmem:[#allocation2 + $0x60] sm:$0xff] %vm333, 0.0
          %347 = vst.msk [vmem:[#allocation2 + $0x68] sm:$0xff] %vm333, 0.0
          %348 = vst.msk [vmem:[#allocation2 + $0x70] sm:$0xff] %vm333, 0.0
          %349 = vst.msk [vmem:[#allocation2 + $0x78] sm:$0xff] %vm333, 0.0
          %350 = vst.msk [vmem:[#allocation2 + $0x80] sm:$0xff] %vm333, 0.0
          %351 = vst.msk [vmem:[#allocation2 + $0x88] sm:$0xff] %vm333, 0.0
          %352 = vst.msk [vmem:[#allocation2 + $0x90] sm:$0xff] %vm333, 0.0
          %353 = vst.msk [vmem:[#allocation2 + $0x98] sm:$0xff] %vm333, 0.0
          %354 = vst.msk [vmem:[#allocation2 + $0xa0] sm:$0xff] %vm333, 0.0
          %355 = vst.msk [vmem:[#allocation2 + $0xa8] sm:$0xff] %vm333, 0.0
          %356 = vst.msk [vmem:[#allocation2 + $0xb0] sm:$0xff] %vm333, 0.0
          %357 = vst.msk [vmem:[#allocation2 + $0xb8] sm:$0xff] %vm333, 0.0
          %358 = vst.msk [vmem:[#allocation2 + $0xc0] sm:$0xff] %vm333, 0.0
          %359 = vst.msk [vmem:[#allocation2 + $0xc8] sm:$0xff] %vm333, 0.0
          %360 = vst.msk [vmem:[#allocation2 + $0xd0] sm:$0xff] %vm333, 0.0
          %361 = vst.msk [vmem:[#allocation2 + $0xd8] sm:$0xff] %vm333, 0.0
          %362 = vst.msk [vmem:[#allocation2 + $0xe0] sm:$0xff] %vm333, 0.0
          %363 = vst.msk [vmem:[#allocation2 + $0xe8] sm:$0xff] %vm333, 0.0
          %364 = vst.msk [vmem:[#allocation2 + $0xf0] sm:$0xff] %vm333, 0.0
          %365 = vst.msk [vmem:[#allocation2 + $0xf8] sm:$0xff] %vm333, 0.0
        $region52: #{tpu_custom_call.1} parent=35 // pred_fallthru
          _
        %v366 = vld [vmem:[#allocation2] sm:$0xff]
        %v367 = vld [vmem:[#allocation2 + $0x8] sm:$0xff]
        %v368 = vld [vmem:[#allocation2 + $0x10] sm:$0xff]
        %v369 = vld [vmem:[#allocation2 + $0x18] sm:$0xff]
        %v370 = vld [vmem:[#allocation2 + $0x20] sm:$0xff]
        %v371 = vld [vmem:[#allocation2 + $0x28] sm:$0xff]
        %v372 = vld [vmem:[#allocation2 + $0x30] sm:$0xff]
        %v373 = vld [vmem:[#allocation2 + $0x38] sm:$0xff]
        %v374 = vld [vmem:[#allocation2 + $0x40] sm:$0xff]
        %v375 = vld [vmem:[#allocation2 + $0x48] sm:$0xff]
        %v376 = vld [vmem:[#allocation2 + $0x50] sm:$0xff]
        %v377 = vld [vmem:[#allocation2 + $0x58] sm:$0xff]
        %v378 = vld [vmem:[#allocation2 + $0x60] sm:$0xff]
        %v379 = vld [vmem:[#allocation2 + $0x68] sm:$0xff]
        %v380 = vld [vmem:[#allocation2 + $0x70] sm:$0xff]
        %v381 = vld [vmem:[#allocation2 + $0x78] sm:$0xff]
        %v382 = vld [vmem:[#allocation2 + $0x80] sm:$0xff]
        %v383 = vld [vmem:[#allocation2 + $0x88] sm:$0xff]
        %v384 = vld [vmem:[#allocation2 + $0x90] sm:$0xff]
        %v385 = vld [vmem:[#allocation2 + $0x98] sm:$0xff]
        %v386 = vld [vmem:[#allocation2 + $0xa0] sm:$0xff]
        %v387 = vld [vmem:[#allocation2 + $0xa8] sm:$0xff]
        %v388 = vld [vmem:[#allocation2 + $0xb0] sm:$0xff]
        %v389 = vld [vmem:[#allocation2 + $0xb8] sm:$0xff]
        %v390 = vld [vmem:[#allocation2 + $0xc0] sm:$0xff]
        %v391 = vld [vmem:[#allocation2 + $0xc8] sm:$0xff]
        %v392 = vld [vmem:[#allocation2 + $0xd0] sm:$0xff]
        %v393 = vld [vmem:[#allocation2 + $0xd8] sm:$0xff]
        %v394 = vld [vmem:[#allocation2 + $0xe0] sm:$0xff]
        %v395 = vld [vmem:[#allocation2 + $0xe8] sm:$0xff]
        %v396 = vld [vmem:[#allocation2 + $0xf0] sm:$0xff]
        %v397 = vld [vmem:[#allocation2 + $0xf8] sm:$0xff]
        %v398 = vld [vmem:[%s262] sm:$0xff]
        %v399 = vld [vmem:[%s262 + $0x8] sm:$0xff]
        %v400 = vld [vmem:[%s262 + $0x10] sm:$0xff]
        %v401 = vld [vmem:[%s262 + $0x18] sm:$0xff]
        %v402 = vld [vmem:[%s262 + $0x20] sm:$0xff]
        %v403 = vld [vmem:[%s262 + $0x28] sm:$0xff]
        %v404 = vld [vmem:[%s262 + $0x30] sm:$0xff]
        %v405 = vld [vmem:[%s262 + $0x38] sm:$0xff]
        %v406 = vld [vmem:[%s262 + $0x40] sm:$0xff]
        %v407 = vld [vmem:[%s262 + $0x48] sm:$0xff]
        %v408 = vld [vmem:[%s262 + $0x50] sm:$0xff]
        %v409 = vld [vmem:[%s262 + $0x58] sm:$0xff]
        %v410 = vld [vmem:[%s262 + $0x60] sm:$0xff]
        %v411 = vld [vmem:[%s262 + $0x68] sm:$0xff]
        %v412 = vld [vmem:[%s262 + $0x70] sm:$0xff]
        %v413 = vld [vmem:[%s262 + $0x78] sm:$0xff]
        %v414 = vld [vmem:[%s262 + $0x80] sm:$0xff]
        %v415 = vld [vmem:[%s262 + $0x88] sm:$0xff]
        %v416 = vld [vmem:[%s262 + $0x90] sm:$0xff]
        %v417 = vld [vmem:[%s262 + $0x98] sm:$0xff]
        %v418 = vld [vmem:[%s262 + $0xa0] sm:$0xff]
        %v419 = vld [vmem:[%s262 + $0xa8] sm:$0xff]
        %v420 = vld [vmem:[%s262 + $0xb0] sm:$0xff]
        %v421 = vld [vmem:[%s262 + $0xb8] sm:$0xff]
        %v422 = vld [vmem:[%s262 + $0xc0] sm:$0xff]
        %v423 = vld [vmem:[%s262 + $0xc8] sm:$0xff]
        %v424 = vld [vmem:[%s262 + $0xd0] sm:$0xff]
        %v425 = vld [vmem:[%s262 + $0xd8] sm:$0xff]
        %v426 = vld [vmem:[%s262 + $0xe0] sm:$0xff]
        %v427 = vld [vmem:[%s262 + $0xe8] sm:$0xff]
        %v428 = vld [vmem:[%s262 + $0xf0] sm:$0xff]
        %v429 = vld [vmem:[%s262 + $0xf8] sm:$0xff]
        %v430 = vld [vmem:[%s318] sm:$0xf]
        %v431 = vld [vmem:[%s318 + $0x4] sm:$0xf]
        %v432 = vld [vmem:[%s318 + $0x8] sm:$0xf]
        %v433 = vld [vmem:[%s318 + $0xc] sm:$0xf]
        %v434 = vld [vmem:[%s318 + $0x10] sm:$0xf]
        %v435 = vld [vmem:[%s318 + $0x14] sm:$0xf]
        %v436 = vld [vmem:[%s318 + $0x18] sm:$0xf]
        %v437 = vld [vmem:[%s318 + $0x1c] sm:$0xf]
        %v438 = vld [vmem:[%s318 + $0x20] sm:$0xf]
        %v439 = vld [vmem:[%s318 + $0x24] sm:$0xf]
        %v440 = vld [vmem:[%s318 + $0x28] sm:$0xf]
        %v441 = vld [vmem:[%s318 + $0x2c] sm:$0xf]
        %v442 = vld [vmem:[%s318 + $0x30] sm:$0xf]
        %v443 = vld [vmem:[%s318 + $0x34] sm:$0xf]
        %v444 = vld [vmem:[%s318 + $0x38] sm:$0xf]
        %v445 = vld [vmem:[%s318 + $0x3c] sm:$0xf]
        %v446 = vld [vmem:[%s318 + $0x40] sm:$0xf]
        %v447 = vld [vmem:[%s318 + $0x44] sm:$0xf]
        %v448 = vld [vmem:[%s318 + $0x48] sm:$0xf]
        %v449 = vld [vmem:[%s318 + $0x4c] sm:$0xf]
        %v450 = vld [vmem:[%s318 + $0x50] sm:$0xf]
        %v451 = vld [vmem:[%s318 + $0x54] sm:$0xf]
        %v452 = vld [vmem:[%s318 + $0x58] sm:$0xf]
        %v453 = vld [vmem:[%s318 + $0x5c] sm:$0xf]
        %v454 = vld [vmem:[%s318 + $0x60] sm:$0xf]
        %v455 = vld [vmem:[%s318 + $0x64] sm:$0xf]
        %v456 = vld [vmem:[%s318 + $0x68] sm:$0xf]
        %v457 = vld [vmem:[%s318 + $0x6c] sm:$0xf]
        %v458 = vld [vmem:[%s318 + $0x70] sm:$0xf]
        %v459 = vld [vmem:[%s318 + $0x74] sm:$0xf]
        %v460 = vld [vmem:[%s318 + $0x78] sm:$0xf]
        %v461 = vld [vmem:[%s318 + $0x7c] sm:$0xf]
        %v494 = vunpack.c.l.b16 %v398
        %v495 = vunpack.c.h.b16 %v398
        %v496 = vunpack.c.l.b16 %v399
        %v497 = vunpack.c.h.b16 %v399
        %v498 = vunpack.c.l.b16 %v400
        %v499 = vunpack.c.h.b16 %v400
        %v500 = vunpack.c.l.b16 %v401
        %v501 = vunpack.c.h.b16 %v401
        %v502 = vunpack.c.l.b16 %v402
        %v503 = vunpack.c.h.b16 %v402
        %v504 = vunpack.c.l.b16 %v403
        %v505 = vunpack.c.h.b16 %v403
        %v506 = vunpack.c.l.b16 %v404
        %v507 = vunpack.c.h.b16 %v404
        %v508 = vunpack.c.l.b16 %v405
        %v509 = vunpack.c.h.b16 %v405
        %v510 = vunpack.c.l.b16 %v406
        %v511 = vunpack.c.h.b16 %v406
        %v512 = vunpack.c.l.b16 %v407
        %v513 = vunpack.c.h.b16 %v407
        %v514 = vunpack.c.l.b16 %v408
        %v515 = vunpack.c.h.b16 %v408
        %v516 = vunpack.c.l.b16 %v409
        %v517 = vunpack.c.h.b16 %v409
        %v518 = vunpack.c.l.b16 %v410
        %v519 = vunpack.c.h.b16 %v410
        %v520 = vunpack.c.l.b16 %v411
        %v521 = vunpack.c.h.b16 %v411
        %v522 = vunpack.c.l.b16 %v412
        %v523 = vunpack.c.h.b16 %v412
        %v524 = vunpack.c.l.b16 %v413
        %v525 = vunpack.c.h.b16 %v413
        %v526 = vunpack.c.l.b16 %v414
        %v527 = vunpack.c.h.b16 %v414
        %v528 = vunpack.c.l.b16 %v415
        %v529 = vunpack.c.h.b16 %v415
        %v530 = vunpack.c.l.b16 %v416
        %v531 = vunpack.c.h.b16 %v416
        %v532 = vunpack.c.l.b16 %v417
        %v533 = vunpack.c.h.b16 %v417
        %v534 = vunpack.c.l.b16 %v418
        %v535 = vunpack.c.h.b16 %v418
        %v536 = vunpack.c.l.b16 %v419
        %v537 = vunpack.c.h.b16 %v419
        %v538 = vunpack.c.l.b16 %v420
        %v539 = vunpack.c.h.b16 %v420
        %v540 = vunpack.c.l.b16 %v421
        %v541 = vunpack.c.h.b16 %v421
        %v542 = vunpack.c.l.b16 %v422
        %v543 = vunpack.c.h.b16 %v422
        %v544 = vunpack.c.l.b16 %v423
        %v545 = vunpack.c.h.b16 %v423
        %v546 = vunpack.c.l.b16 %v424
        %v547 = vunpack.c.h.b16 %v424
        %v548 = vunpack.c.l.b16 %v425
        %v549 = vunpack.c.h.b16 %v425
        %v550 = vunpack.c.l.b16 %v426
        %v551 = vunpack.c.h.b16 %v426
        %v552 = vunpack.c.l.b16 %v427
        %v553 = vunpack.c.h.b16 %v427
        %v554 = vunpack.c.l.b16 %v428
        %v555 = vunpack.c.h.b16 %v428
        %v556 = vunpack.c.l.b16 %v429
        %v557 = vunpack.c.h.b16 %v429
        %v558 = vpack.c.b16 %v496, %v494
        %v559 = vpack.c.b16 %v497, %v495
        %v560 = vpack.c.b16 %v500, %v498
        %v561 = vpack.c.b16 %v501, %v499
        %v562 = vpack.c.b16 %v504, %v502
        %v563 = vpack.c.b16 %v505, %v503
        %v564 = vpack.c.b16 %v508, %v506
        %v565 = vpack.c.b16 %v509, %v507
        %v566 = vpack.c.b16 %v512, %v510
        %v567 = vpack.c.b16 %v513, %v511
        %v568 = vpack.c.b16 %v516, %v514
        %v569 = vpack.c.b16 %v517, %v515
        %v570 = vpack.c.b16 %v520, %v518
        %v571 = vpack.c.b16 %v521, %v519
        %v572 = vpack.c.b16 %v524, %v522
        %v573 = vpack.c.b16 %v525, %v523
        %v574 = vpack.c.b16 %v528, %v526
        %v575 = vpack.c.b16 %v529, %v527
        %v576 = vpack.c.b16 %v532, %v530
        %v577 = vpack.c.b16 %v533, %v531
        %v578 = vpack.c.b16 %v536, %v534
        %v579 = vpack.c.b16 %v537, %v535
        %v580 = vpack.c.b16 %v540, %v538
        %v581 = vpack.c.b16 %v541, %v539
        %v582 = vpack.c.b16 %v544, %v542
        %v583 = vpack.c.b16 %v545, %v543
        %v584 = vpack.c.b16 %v548, %v546
        %v585 = vpack.c.b16 %v549, %v547
        %v586 = vpack.c.b16 %v552, %v550
        %v587 = vpack.c.b16 %v553, %v551
        %v588 = vpack.c.b16 %v556, %v554
        %v589 = vpack.c.b16 %v557, %v555
        %v654 = vunpack.c.l.b16 %v430
        %v655 = vunpack.c.l.b16 %v431
        %v656 = vunpack.c.l.b16 %v432
        %v657 = vunpack.c.l.b16 %v433
        %v658 = vunpack.c.l.b16 %v434
        %v659 = vunpack.c.l.b16 %v435
        %v660 = vunpack.c.l.b16 %v436
        %v661 = vunpack.c.l.b16 %v437
        %v662 = vunpack.c.l.b16 %v438
        %v663 = vunpack.c.l.b16 %v439
        %v664 = vunpack.c.l.b16 %v440
        %v665 = vunpack.c.l.b16 %v441
        %v666 = vunpack.c.l.b16 %v442
        %v667 = vunpack.c.l.b16 %v443
        %v668 = vunpack.c.l.b16 %v444
        %v669 = vunpack.c.l.b16 %v445
        %v670 = vunpack.c.l.b16 %v446
        %v671 = vunpack.c.l.b16 %v447
        %v672 = vunpack.c.l.b16 %v448
        %v673 = vunpack.c.l.b16 %v449
        %v674 = vunpack.c.l.b16 %v450
        %v675 = vunpack.c.l.b16 %v451
        %v676 = vunpack.c.l.b16 %v452
        %v677 = vunpack.c.l.b16 %v453
        %v678 = vunpack.c.l.b16 %v454
        %v679 = vunpack.c.l.b16 %v455
        %v680 = vunpack.c.l.b16 %v456
        %v681 = vunpack.c.l.b16 %v457
        %v682 = vunpack.c.l.b16 %v458
        %v683 = vunpack.c.l.b16 %v459
        %v684 = vunpack.c.l.b16 %v460
        %v685 = vunpack.c.l.b16 %v461
        %v686 = vpack.c.b16 %v655, %v654
        %v687 = vpack.c.b16 %v657, %v656
        %v688 = vpack.c.b16 %v659, %v658
        %v689 = vpack.c.b16 %v661, %v660
        %v690 = vpack.c.b16 %v663, %v662
        %v691 = vpack.c.b16 %v665, %v664
        %v692 = vpack.c.b16 %v667, %v666
        %v693 = vpack.c.b16 %v669, %v668
        %v694 = vpack.c.b16 %v671, %v670
        %v695 = vpack.c.b16 %v673, %v672
        %v696 = vpack.c.b16 %v675, %v674
        %v697 = vpack.c.b16 %v677, %v676
        %v698 = vpack.c.b16 %v679, %v678
        %v699 = vpack.c.b16 %v681, %v680
        %v700 = vpack.c.b16 %v683, %v682
        %v701 = vpack.c.b16 %v685, %v684
        %718 = vmatpush.bf16.msra.mxu0 %v693
        %719 = vmatpush.bf16.msra.mxu0 %v692
        %720 = vmatpush.bf16.msra.mxu0 %v691
        %721 = vmatpush.bf16.msra.mxu0 %v690
        %722 = vmatpush.bf16.msra.mxu0 %v689
        %723 = vmatpush.bf16.msra.mxu0 %v688
        %724 = vmatpush.bf16.msra.mxu0 %v687
        %725 = vmatpush.bf16.msra.mxu0 %v686
        %726 = vmatmul.bf16.gmra.mxu0 %v558
        %v727 = vpop.f32.mrf.mxu0
        %v728 = vadd.f32 0.0, %v727
        %v729 = vpop.f32.mrf.mxu0
        %v730 = vadd.f32 0.0, %v729
        %731 = vmatmul.bf16.gmra.mxu0 %v560
        %v732 = vpop.f32.mrf.mxu0
        %v733 = vadd.f32 0.0, %v732
        %v734 = vpop.f32.mrf.mxu0
        %v735 = vadd.f32 0.0, %v734
        %736 = vmatmul.bf16.gmra.mxu0 %v562
        %v737 = vpop.f32.mrf.mxu0
        %v738 = vadd.f32 0.0, %v737
        %v739 = vpop.f32.mrf.mxu0
        %v740 = vadd.f32 0.0, %v739
        %741 = vmatmul.bf16.gmra.mxu0 %v564
        %v742 = vpop.f32.mrf.mxu0
        %v743 = vadd.f32 0.0, %v742
        %v744 = vpop.f32.mrf.mxu0
        %v745 = vadd.f32 0.0, %v744
        %746 = vmatmul.bf16.gmra.mxu0 %v566
        %v747 = vpop.f32.mrf.mxu0
        %v748 = vadd.f32 0.0, %v747
        %v749 = vpop.f32.mrf.mxu0
        %v750 = vadd.f32 0.0, %v749
        %751 = vmatmul.bf16.gmra.mxu0 %v568
        %v752 = vpop.f32.mrf.mxu0
        %v753 = vadd.f32 0.0, %v752
        %v754 = vpop.f32.mrf.mxu0
        %v755 = vadd.f32 0.0, %v754
        %756 = vmatmul.bf16.gmra.mxu0 %v570
        %v757 = vpop.f32.mrf.mxu0
        %v758 = vadd.f32 0.0, %v757
        %v759 = vpop.f32.mrf.mxu0
        %v760 = vadd.f32 0.0, %v759
        %761 = vmatmul.bf16.gmra.mxu0 %v572
        %v762 = vpop.f32.mrf.mxu0
        %v763 = vadd.f32 0.0, %v762
        %v764 = vpop.f32.mrf.mxu0
        %v765 = vadd.f32 0.0, %v764
        %766 = vmatmul.bf16.gmra.mxu0 %v574
        %v767 = vpop.f32.mrf.mxu0
        %v768 = vadd.f32 0.0, %v767
        %v769 = vpop.f32.mrf.mxu0
        %v770 = vadd.f32 0.0, %v769
        %771 = vmatmul.bf16.gmra.mxu0 %v576
        %v772 = vpop.f32.mrf.mxu0
        %v773 = vadd.f32 0.0, %v772
        %v774 = vpop.f32.mrf.mxu0
        %v775 = vadd.f32 0.0, %v774
        %776 = vmatmul.bf16.gmra.mxu0 %v578
        %v777 = vpop.f32.mrf.mxu0
        %v778 = vadd.f32 0.0, %v777
        %v779 = vpop.f32.mrf.mxu0
        %v780 = vadd.f32 0.0, %v779
        %781 = vmatmul.bf16.gmra.mxu0 %v580
        %v782 = vpop.f32.mrf.mxu0
        %v783 = vadd.f32 0.0, %v782
        %v784 = vpop.f32.mrf.mxu0
        %v785 = vadd.f32 0.0, %v784
        %786 = vmatmul.bf16.gmra.mxu0 %v582
        %v787 = vpop.f32.mrf.mxu0
        %v788 = vadd.f32 0.0, %v787
        %v789 = vpop.f32.mrf.mxu0
        %v790 = vadd.f32 0.0, %v789
        %791 = vmatmul.bf16.gmra.mxu0 %v584
        %v792 = vpop.f32.mrf.mxu0
        %v793 = vadd.f32 0.0, %v792
        %v794 = vpop.f32.mrf.mxu0
        %v795 = vadd.f32 0.0, %v794
        %796 = vmatmul.bf16.gmra.mxu0 %v586
        %v797 = vpop.f32.mrf.mxu0
        %v798 = vadd.f32 0.0, %v797
        %v799 = vpop.f32.mrf.mxu0
        %v800 = vadd.f32 0.0, %v799
        %801 = vmatmul.bf16.gmra.mxu0 %v588
        %v802 = vpop.f32.mrf.mxu0
        %v803 = vadd.f32 0.0, %v802
        %v804 = vpop.f32.mrf.mxu0
        %v805 = vadd.f32 0.0, %v804
        %806 = vdwg.mxu0
        %807 = vmatpush.bf16.msra.mxu0 %v701
        %808 = vmatpush.bf16.msra.mxu0 %v700
        %809 = vmatpush.bf16.msra.mxu0 %v699
        %810 = vmatpush.bf16.msra.mxu0 %v698
        %811 = vmatpush.bf16.msra.mxu0 %v697
        %812 = vmatpush.bf16.msra.mxu0 %v696
        %813 = vmatpush.bf16.msra.mxu0 %v695
        %814 = vmatpush.bf16.msra.mxu0 %v694
        %815 = vmatmul.bf16.gmra.mxu0 %v559
        %v816 = vpop.f32.mrf.mxu0
        %v817 = vadd.f32 %v728, %v816
        %v818 = vpop.f32.mrf.mxu0
        %v819 = vadd.f32 %v730, %v818
        %820 = vmatmul.bf16.gmra.mxu0 %v561
        %v821 = vpop.f32.mrf.mxu0
        %v822 = vadd.f32 %v733, %v821
        %v823 = vpop.f32.mrf.mxu0
        %v824 = vadd.f32 %v735, %v823
        %825 = vmatmul.bf16.gmra.mxu0 %v563
        %v826 = vpop.f32.mrf.mxu0
        %v827 = vadd.f32 %v738, %v826
        %v828 = vpop.f32.mrf.mxu0
        %v829 = vadd.f32 %v740, %v828
        %830 = vmatmul.bf16.gmra.mxu0 %v565
        %v831 = vpop.f32.mrf.mxu0
        %v832 = vadd.f32 %v743, %v831
        %v833 = vpop.f32.mrf.mxu0
        %v834 = vadd.f32 %v745, %v833
        %835 = vmatmul.bf16.gmra.mxu0 %v567
        %v836 = vpop.f32.mrf.mxu0
        %v837 = vadd.f32 %v748, %v836
        %v838 = vpop.f32.mrf.mxu0
        %v839 = vadd.f32 %v750, %v838
        %840 = vmatmul.bf16.gmra.mxu0 %v569
        %v841 = vpop.f32.mrf.mxu0
        %v842 = vadd.f32 %v753, %v841
        %v843 = vpop.f32.mrf.mxu0
        %v844 = vadd.f32 %v755, %v843
        %845 = vmatmul.bf16.gmra.mxu0 %v571
        %v846 = vpop.f32.mrf.mxu0
        %v847 = vadd.f32 %v758, %v846
        %v848 = vpop.f32.mrf.mxu0
        %v849 = vadd.f32 %v760, %v848
        %850 = vmatmul.bf16.gmra.mxu0 %v573
        %v851 = vpop.f32.mrf.mxu0
        %v852 = vadd.f32 %v763, %v851
        %v853 = vpop.f32.mrf.mxu0
        %v854 = vadd.f32 %v765, %v853
        %855 = vmatmul.bf16.gmra.mxu0 %v575
        %v856 = vpop.f32.mrf.mxu0
        %v857 = vadd.f32 %v768, %v856
        %v858 = vpop.f32.mrf.mxu0
        %v859 = vadd.f32 %v770, %v858
        %860 = vmatmul.bf16.gmra.mxu0 %v577
        %v861 = vpop.f32.mrf.mxu0
        %v862 = vadd.f32 %v773, %v861
        %v863 = vpop.f32.mrf.mxu0
        %v864 = vadd.f32 %v775, %v863
        %865 = vmatmul.bf16.gmra.mxu0 %v579
        %v866 = vpop.f32.mrf.mxu0
        %v867 = vadd.f32 %v778, %v866
        %v868 = vpop.f32.mrf.mxu0
        %v869 = vadd.f32 %v780, %v868
        %870 = vmatmul.bf16.gmra.mxu0 %v581
        %v871 = vpop.f32.mrf.mxu0
        %v872 = vadd.f32 %v783, %v871
        %v873 = vpop.f32.mrf.mxu0
        %v874 = vadd.f32 %v785, %v873
        %875 = vmatmul.bf16.gmra.mxu0 %v583
        %v876 = vpop.f32.mrf.mxu0
        %v877 = vadd.f32 %v788, %v876
        %v878 = vpop.f32.mrf.mxu0
        %v879 = vadd.f32 %v790, %v878
        %880 = vmatmul.bf16.gmra.mxu0 %v585
        %v881 = vpop.f32.mrf.mxu0
        %v882 = vadd.f32 %v793, %v881
        %v883 = vpop.f32.mrf.mxu0
        %v884 = vadd.f32 %v795, %v883
        %885 = vmatmul.bf16.gmra.mxu0 %v587
        %v886 = vpop.f32.mrf.mxu0
        %v887 = vadd.f32 %v798, %v886
        %v888 = vpop.f32.mrf.mxu0
        %v889 = vadd.f32 %v800, %v888
        %890 = vmatmul.bf16.gmra.mxu0 %v589
        %v891 = vpop.f32.mrf.mxu0
        %v892 = vadd.f32 %v803, %v891
        %v893 = vpop.f32.mrf.mxu0
        %v894 = vadd.f32 %v805, %v893
        %895 = vdwg.mxu0
        %v896 = vadd.f32 %v366, %v817
        %v897 = vadd.f32 %v367, %v819
        %v898 = vadd.f32 %v368, %v822
        %v899 = vadd.f32 %v369, %v824
        %v900 = vadd.f32 %v370, %v827
        %v901 = vadd.f32 %v371, %v829
        %v902 = vadd.f32 %v372, %v832
        %v903 = vadd.f32 %v373, %v834
        %v904 = vadd.f32 %v374, %v837
        %v905 = vadd.f32 %v375, %v839
        %v906 = vadd.f32 %v376, %v842
        %v907 = vadd.f32 %v377, %v844
        %v908 = vadd.f32 %v378, %v847
        %v909 = vadd.f32 %v379, %v849
        %v910 = vadd.f32 %v380, %v852
        %v911 = vadd.f32 %v381, %v854
        %v912 = vadd.f32 %v382, %v857
        %v913 = vadd.f32 %v383, %v859
        %v914 = vadd.f32 %v384, %v862
        %v915 = vadd.f32 %v385, %v864
        %v916 = vadd.f32 %v386, %v867
        %v917 = vadd.f32 %v387, %v869
        %v918 = vadd.f32 %v388, %v872
        %v919 = vadd.f32 %v389, %v874
        %v920 = vadd.f32 %v390, %v877
        %v921 = vadd.f32 %v391, %v879
        %v922 = vadd.f32 %v392, %v882
        %v923 = vadd.f32 %v393, %v884
        %v924 = vadd.f32 %v394, %v887
        %v925 = vadd.f32 %v395, %v889
        %v926 = vadd.f32 %v396, %v892
        %v927 = vadd.f32 %v397, %v894
        %vm928 = vcmask 523264
        %929 = vst.msk [vmem:[#allocation2] sm:$0xff] %vm928, %v896
        %930 = vst.msk [vmem:[#allocation2 + $0x8] sm:$0xff] %vm928, %v897
        %931 = vst.msk [vmem:[#allocation2 + $0x10] sm:$0xff] %vm928, %v898
        %932 = vst.msk [vmem:[#allocation2 + $0x18] sm:$0xff] %vm928, %v899
        %933 = vst.msk [vmem:[#allocation2 + $0x20] sm:$0xff] %vm928, %v900
        %934 = vst.msk [vmem:[#allocation2 + $0x28] sm:$0xff] %vm928, %v901
        %935 = vst.msk [vmem:[#allocation2 + $0x30] sm:$0xff] %vm928, %v902
        %936 = vst.msk [vmem:[#allocation2 + $0x38] sm:$0xff] %vm928, %v903
        %937 = vst.msk [vmem:[#allocation2 + $0x40] sm:$0xff] %vm928, %v904
        %938 = vst.msk [vmem:[#allocation2 + $0x48] sm:$0xff] %vm928, %v905
        %939 = vst.msk [vmem:[#allocation2 + $0x50] sm:$0xff] %vm928, %v906
        %940 = vst.msk [vmem:[#allocation2 + $0x58] sm:$0xff] %vm928, %v907
        %941 = vst.msk [vmem:[#allocation2 + $0x60] sm:$0xff] %vm928, %v908
        %942 = vst.msk [vmem:[#allocation2 + $0x68] sm:$0xff] %vm928, %v909
        %943 = vst.msk [vmem:[#allocation2 + $0x70] sm:$0xff] %vm928, %v910
        %944 = vst.msk [vmem:[#allocation2 + $0x78] sm:$0xff] %vm928, %v911
        %945 = vst.msk [vmem:[#allocation2 + $0x80] sm:$0xff] %vm928, %v912
        %946 = vst.msk [vmem:[#allocation2 + $0x88] sm:$0xff] %vm928, %v913
        %947 = vst.msk [vmem:[#allocation2 + $0x90] sm:$0xff] %vm928, %v914
        %948 = vst.msk [vmem:[#allocation2 + $0x98] sm:$0xff] %vm928, %v915
        %949 = vst.msk [vmem:[#allocation2 + $0xa0] sm:$0xff] %vm928, %v916
        %950 = vst.msk [vmem:[#allocation2 + $0xa8] sm:$0xff] %vm928, %v917
        %951 = vst.msk [vmem:[#allocation2 + $0xb0] sm:$0xff] %vm928, %v918
        %952 = vst.msk [vmem:[#allocation2 + $0xb8] sm:$0xff] %vm928, %v919
        %953 = vst.msk [vmem:[#allocation2 + $0xc0] sm:$0xff] %vm928, %v920
        %954 = vst.msk [vmem:[#allocation2 + $0xc8] sm:$0xff] %vm928, %v921
        %955 = vst.msk [vmem:[#allocation2 + $0xd0] sm:$0xff] %vm928, %v922
        %956 = vst.msk [vmem:[#allocation2 + $0xd8] sm:$0xff] %vm928, %v923
        %957 = vst.msk [vmem:[#allocation2 + $0xe0] sm:$0xff] %vm928, %v924
        %958 = vst.msk [vmem:[#allocation2 + $0xe8] sm:$0xff] %vm928, %v925
        %959 = vst.msk [vmem:[#allocation2 + $0xf0] sm:$0xff] %vm928, %v926
        %960 = vst.msk [vmem:[#allocation2 + $0xf8] sm:$0xff] %vm928, %v927
        %p961 = scmp.eq.s32.totalorder %s26, 4
        // Predicated region
        $region53: #{tpu_custom_call.1} parent=35 // pred_check
          %p962 = pneg %p961
        $region54: #{tpu_custom_call.1} parent=35 // pred_check_branch
          %964 = sbr.rel (%p962) target = $region56
        $region55: #{tpu_custom_call.1} parent=35 // pred_region
          %v965 = vld [vmem:[#allocation2] sm:$0xff]
          %v966 = vld [vmem:[#allocation2 + $0x8] sm:$0xff]
          %v967 = vld [vmem:[#allocation2 + $0x10] sm:$0xff]
          %v968 = vld [vmem:[#allocation2 + $0x18] sm:$0xff]
          %v969 = vld [vmem:[#allocation2 + $0x20] sm:$0xff]
          %v970 = vld [vmem:[#allocation2 + $0x28] sm:$0xff]
          %v971 = vld [vmem:[#allocation2 + $0x30] sm:$0xff]
          %v972 = vld [vmem:[#allocation2 + $0x38] sm:$0xff]
          %v973 = vld [vmem:[#allocation2 + $0x40] sm:$0xff]
          %v974 = vld [vmem:[#allocation2 + $0x48] sm:$0xff]
          %v975 = vld [vmem:[#allocation2 + $0x50] sm:$0xff]
          %v976 = vld [vmem:[#allocation2 + $0x58] sm:$0xff]
          %v977 = vld [vmem:[#allocation2 + $0x60] sm:$0xff]
          %v978 = vld [vmem:[#allocation2 + $0x68] sm:$0xff]
          %v979 = vld [vmem:[#allocation2 + $0x70] sm:$0xff]
          %v980 = vld [vmem:[#allocation2 + $0x78] sm:$0xff]
          %v981 = vld [vmem:[#allocation2 + $0x80] sm:$0xff]
          %v982 = vld [vmem:[#allocation2 + $0x88] sm:$0xff]
          %v983 = vld [vmem:[#allocation2 + $0x90] sm:$0xff]
          %v984 = vld [vmem:[#allocation2 + $0x98] sm:$0xff]
          %v985 = vld [vmem:[#allocation2 + $0xa0] sm:$0xff]
          %v986 = vld [vmem:[#allocation2 + $0xa8] sm:$0xff]
          %v987 = vld [vmem:[#allocation2 + $0xb0] sm:$0xff]
          %v988 = vld [vmem:[#allocation2 + $0xb8] sm:$0xff]
          %v989 = vld [vmem:[#allocation2 + $0xc0] sm:$0xff]
          %v990 = vld [vmem:[#allocation2 + $0xc8] sm:$0xff]
          %v991 = vld [vmem:[#allocation2 + $0xd0] sm:$0xff]
          %v992 = vld [vmem:[#allocation2 + $0xd8] sm:$0xff]
          %v993 = vld [vmem:[#allocation2 + $0xe0] sm:$0xff]
          %v994 = vld [vmem:[#allocation2 + $0xe8] sm:$0xff]
          %v995 = vld [vmem:[#allocation2 + $0xf0] sm:$0xff]
          %v996 = vld [vmem:[#allocation2 + $0xf8] sm:$0xff]
          %v997 = vld [vmem:[#allocation5] sm:$0x1]
          %v999 = vperm.slane %v997, 0
          %v1001 = vmul.f32 %v965, %v999
          %v1002 = vmul.f32 %v966, %v999
          %v1003 = vmul.f32 %v967, %v999
          %v1004 = vmul.f32 %v968, %v999
          %v1005 = vmul.f32 %v969, %v999
          %v1006 = vmul.f32 %v970, %v999
          %v1007 = vmul.f32 %v971, %v999
          %v1008 = vmul.f32 %v972, %v999
          %v1009 = vmul.f32 %v973, %v999
          %v1010 = vmul.f32 %v974, %v999
          %v1011 = vmul.f32 %v975, %v999
          %v1012 = vmul.f32 %v976, %v999
          %v1013 = vmul.f32 %v977, %v999
          %v1014 = vmul.f32 %v978, %v999
          %v1015 = vmul.f32 %v979, %v999
          %v1016 = vmul.f32 %v980, %v999
          %v1017 = vmul.f32 %v981, %v999
          %v1018 = vmul.f32 %v982, %v999
          %v1019 = vmul.f32 %v983, %v999
          %v1020 = vmul.f32 %v984, %v999
          %v1021 = vmul.f32 %v985, %v999
          %v1022 = vmul.f32 %v986, %v999
          %v1023 = vmul.f32 %v987, %v999
          %v1024 = vmul.f32 %v988, %v999
          %v1025 = vmul.f32 %v989, %v999
          %v1026 = vmul.f32 %v990, %v999
          %v1027 = vmul.f32 %v991, %v999
          %v1028 = vmul.f32 %v992, %v999
          %v1029 = vmul.f32 %v993, %v999
          %v1030 = vmul.f32 %v994, %v999
          %v1031 = vmul.f32 %v995, %v999
          %v1032 = vmul.f32 %v996, %v999
          %v1033 = vld [vmem:[#allocation7] sm:$0x1]
          %v1035 = vperm.slane %v1033, 0
          %v1037 = vadd.f32 %v1001, %v1035
          %v1038 = vadd.f32 %v1002, %v1035
          %v1039 = vadd.f32 %v1003, %v1035
          %v1040 = vadd.f32 %v1004, %v1035
          %v1041 = vadd.f32 %v1005, %v1035
          %v1042 = vadd.f32 %v1006, %v1035
          %v1043 = vadd.f32 %v1007, %v1035
          %v1044 = vadd.f32 %v1008, %v1035
          %v1045 = vadd.f32 %v1009, %v1035
          %v1046 = vadd.f32 %v1010, %v1035
          %v1047 = vadd.f32 %v1011, %v1035
          %v1048 = vadd.f32 %v1012, %v1035
          %v1049 = vadd.f32 %v1013, %v1035
          %v1050 = vadd.f32 %v1014, %v1035
          %v1051 = vadd.f32 %v1015, %v1035
          %v1052 = vadd.f32 %v1016, %v1035
          %v1053 = vadd.f32 %v1017, %v1035
          %v1054 = vadd.f32 %v1018, %v1035
          %v1055 = vadd.f32 %v1019, %v1035
          %v1056 = vadd.f32 %v1020, %v1035
          %v1057 = vadd.f32 %v1021, %v1035
          %v1058 = vadd.f32 %v1022, %v1035
          %v1059 = vadd.f32 %v1023, %v1035
          %v1060 = vadd.f32 %v1024, %v1035
          %v1061 = vadd.f32 %v1025, %v1035
          %v1062 = vadd.f32 %v1026, %v1035
          %v1063 = vadd.f32 %v1027, %v1035
          %v1064 = vadd.f32 %v1028, %v1035
          %v1065 = vadd.f32 %v1029, %v1035
          %v1066 = vadd.f32 %v1030, %v1035
          %v1067 = vadd.f32 %v1031, %v1035
          %v1068 = vadd.f32 %v1032, %v1035
          %v1069 = vmax.f32 %v1037, 0.0
          %v1070 = vmax.f32 %v1038, 0.0
          %v1071 = vmax.f32 %v1039, 0.0
          %v1072 = vmax.f32 %v1040, 0.0
          %v1073 = vmax.f32 %v1041, 0.0
          %v1074 = vmax.f32 %v1042, 0.0
          %v1075 = vmax.f32 %v1043, 0.0
          %v1076 = vmax.f32 %v1044, 0.0
          %v1077 = vmax.f32 %v1045, 0.0
          %v1078 = vmax.f32 %v1046, 0.0
          %v1079 = vmax.f32 %v1047, 0.0
          %v1080 = vmax.f32 %v1048, 0.0
          %v1081 = vmax.f32 %v1049, 0.0
          %v1082 = vmax.f32 %v1050, 0.0
          %v1083 = vmax.f32 %v1051, 0.0
          %v1084 = vmax.f32 %v1052, 0.0
          %v1085 = vmax.f32 %v1053, 0.0
          %v1086 = vmax.f32 %v1054, 0.0
          %v1087 = vmax.f32 %v1055, 0.0
          %v1088 = vmax.f32 %v1056, 0.0
          %v1089 = vmax.f32 %v1057, 0.0
          %v1090 = vmax.f32 %v1058, 0.0
          %v1091 = vmax.f32 %v1059, 0.0
          %v1092 = vmax.f32 %v1060, 0.0
          %v1093 = vmax.f32 %v1061, 0.0
          %v1094 = vmax.f32 %v1062, 0.0
          %v1095 = vmax.f32 %v1063, 0.0
          %v1096 = vmax.f32 %v1064, 0.0
          %v1097 = vmax.f32 %v1065, 0.0
          %v1098 = vmax.f32 %v1066, 0.0
          %v1099 = vmax.f32 %v1067, 0.0
          %v1100 = vmax.f32 %v1068, 0.0
          %v1101 = vpack.c.bf16 %v1069, %v1069
          %v1102 = vpack.c.bf16 %v1070, %v1070
          %v1103 = vpack.c.bf16 %v1071, %v1071
          %v1104 = vpack.c.bf16 %v1072, %v1072
          %v1105 = vpack.c.bf16 %v1073, %v1073
          %v1106 = vpack.c.bf16 %v1074, %v1074
          %v1107 = vpack.c.bf16 %v1075, %v1075
          %v1108 = vpack.c.bf16 %v1076, %v1076
          %v1109 = vpack.c.bf16 %v1077, %v1077
          %v1110 = vpack.c.bf16 %v1078, %v1078
          %v1111 = vpack.c.bf16 %v1079, %v1079
          %v1112 = vpack.c.bf16 %v1080, %v1080
          %v1113 = vpack.c.bf16 %v1081, %v1081
          %v1114 = vpack.c.bf16 %v1082, %v1082
          %v1115 = vpack.c.bf16 %v1083, %v1083
          %v1116 = vpack.c.bf16 %v1084, %v1084
          %v1117 = vpack.c.bf16 %v1085, %v1085
          %v1118 = vpack.c.bf16 %v1086, %v1086
          %v1119 = vpack.c.bf16 %v1087, %v1087
          %v1120 = vpack.c.bf16 %v1088, %v1088
          %v1121 = vpack.c.bf16 %v1089, %v1089
          %v1122 = vpack.c.bf16 %v1090, %v1090
          %v1123 = vpack.c.bf16 %v1091, %v1091
          %v1124 = vpack.c.bf16 %v1092, %v1092
          %v1125 = vpack.c.bf16 %v1093, %v1093
          %v1126 = vpack.c.bf16 %v1094, %v1094
          %v1127 = vpack.c.bf16 %v1095, %v1095
          %v1128 = vpack.c.bf16 %v1096, %v1096
          %v1129 = vpack.c.bf16 %v1097, %v1097
          %v1130 = vpack.c.bf16 %v1098, %v1098
          %v1131 = vpack.c.bf16 %v1099, %v1099
          %v1132 = vpack.c.bf16 %v1100, %v1100
          %vm1133 = vcmask 519168
          %1134 = vst.msk [vmem:[%s327] sm:$0xf] %vm1133, %v1101
          %1135 = vst.msk [vmem:[%s327 + $0x4] sm:$0xf] %vm1133, %v1102
          %1136 = vst.msk [vmem:[%s327 + $0x8] sm:$0xf] %vm1133, %v1103
          %1137 = vst.msk [vmem:[%s327 + $0xc] sm:$0xf] %vm1133, %v1104
          %1138 = vst.msk [vmem:[%s327 + $0x10] sm:$0xf] %vm1133, %v1105
          %1139 = vst.msk [vmem:[%s327 + $0x14] sm:$0xf] %vm1133, %v1106
          %1140 = vst.msk [vmem:[%s327 + $0x18] sm:$0xf] %vm1133, %v1107
          %1141 = vst.msk [vmem:[%s327 + $0x1c] sm:$0xf] %vm1133, %v1108
          %1142 = vst.msk [vmem:[%s327 + $0x20] sm:$0xf] %vm1133, %v1109
          %1143 = vst.msk [vmem:[%s327 + $0x24] sm:$0xf] %vm1133, %v1110
          %1144 = vst.msk [vmem:[%s327 + $0x28] sm:$0xf] %vm1133, %v1111
          %1145 = vst.msk [vmem:[%s327 + $0x2c] sm:$0xf] %vm1133, %v1112
          %1146 = vst.msk [vmem:[%s327 + $0x30] sm:$0xf] %vm1133, %v1113
          %1147 = vst.msk [vmem:[%s327 + $0x34] sm:$0xf] %vm1133, %v1114
          %1148 = vst.msk [vmem:[%s327 + $0x38] sm:$0xf] %vm1133, %v1115
          %1149 = vst.msk [vmem:[%s327 + $0x3c] sm:$0xf] %vm1133, %v1116
          %1150 = vst.msk [vmem:[%s327 + $0x40] sm:$0xf] %vm1133, %v1117
          %1151 = vst.msk [vmem:[%s327 + $0x44] sm:$0xf] %vm1133, %v1118
          %1152 = vst.msk [vmem:[%s327 + $0x48] sm:$0xf] %vm1133, %v1119
          %1153 = vst.msk [vmem:[%s327 + $0x4c] sm:$0xf] %vm1133, %v1120
          %1154 = vst.msk [vmem:[%s327 + $0x50] sm:$0xf] %vm1133, %v1121
          %1155 = vst.msk [vmem:[%s327 + $0x54] sm:$0xf] %vm1133, %v1122
          %1156 = vst.msk [vmem:[%s327 + $0x58] sm:$0xf] %vm1133, %v1123
          %1157 = vst.msk [vmem:[%s327 + $0x5c] sm:$0xf] %vm1133, %v1124
          %1158 = vst.msk [vmem:[%s327 + $0x60] sm:$0xf] %vm1133, %v1125
          %1159 = vst.msk [vmem:[%s327 + $0x64] sm:$0xf] %vm1133, %v1126
          %1160 = vst.msk [vmem:[%s327 + $0x68] sm:$0xf] %vm1133, %v1127
          %1161 = vst.msk [vmem:[%s327 + $0x6c] sm:$0xf] %vm1133, %v1128
          %1162 = vst.msk [vmem:[%s327 + $0x70] sm:$0xf] %vm1133, %v1129
          %1163 = vst.msk [vmem:[%s327 + $0x74] sm:$0xf] %vm1133, %v1130
          %1164 = vst.msk [vmem:[%s327 + $0x78] sm:$0xf] %vm1133, %v1131
          %1165 = vst.msk [vmem:[%s327 + $0x7c] sm:$0xf] %vm1133, %v1132
        $region56: #{tpu_custom_call.1} parent=35 // pred_fallthru
          _
        %s1166 = smul.u32 32, %s24
        %p1167 = scmp.lt.s32.totalorder %s1166, 511
        %s1168 = scalar_select %p1167, %s1166, 511
        %p1169 = scmp.lt.s32.totalorder %s25, 0
        %s1170 = scalar_select %p1169, %s25, 0
        %s1171 = sadd.s32 %s1170, %s1168
        %s1172 = smul.addr %s1171, 4
        %s1173 = scalar_lea.vmem %s4, %s1172
        // Predicated region
        $region57: #{tpu_custom_call.1} parent=35 // pred_check
          %p1174 = pneg %p166
        $region58: #{tpu_custom_call.1} parent=35 // pred_check_branch
          %1176 = sbr.rel (%p1174) target = $region60
        $region59: #{tpu_custom_call.1} parent=35 // pred_region
          %s1177 = smul.u32 32, %s24
        $region60: #{tpu_custom_call.1} parent=35 // pred_fallthru
          _
      $region36: #{tpu_custom_call.1} parent=5 // pred_fallthru
        _
      %p1178 = scmp.le.s32.totalorder 2, %s14
      // Predicated region
      $region61: #{tpu_custom_call.1} parent=5 // pred_check
        %p1179 = pneg %p1178
      $region62: #{tpu_custom_call.1} parent=5 // pred_check_branch
        %1181 = sbr.rel (%p1179) target = $region64
      $region63: #{tpu_custom_call.1} parent=5 // pred_region
        %s1182 = ssub.s32 %s14, 2
        // Predicated region
        $region65: #{tpu_custom_call.1} parent=63 // pred_check
          %p1183 = pneg %p172
        $region66: #{tpu_custom_call.1} parent=63 // pred_check_branch
          %1185 = sbr.rel (%p1183) target = $region68
        $region67: #{tpu_custom_call.1} parent=63 // pred_region
          %s1186 = smul.u32 32, %s27
          %p1187 = scmp.lt.s32.totalorder %s1186, 511
          %s1188 = scalar_select %p1187, %s1186, 511
          %p1189 = scmp.lt.s32.totalorder %s28, 0
          %s1190 = scalar_select %p1189, %s28, 0
          %s1191 = sadd.s32 %s1190, %s1188
          %s1192 = smul.addr %s1191, 4
          %s1193 = scalar_lea.vmem %s4, %s1192
        $region68: #{tpu_custom_call.1} parent=63 // pred_fallthru
          _
      $region64: #{tpu_custom_call.1} parent=5 // pred_fallthru
        _
    $region6: #{tpu_custom_call.1} parent=1 // loop_footer
      %s18 = sadd.s32 1, %s14
    $region7: #{tpu_custom_call.1} parent=1 // loop_footer_branch
      %13 = sbr.rel target = $region3
    $region8: #{tpu_custom_call.1} parent=1 // loop_exit
      _
    %1194 = vsyncpa [#allocation4], 1
    %s1195 = scalar_lea.sflag [#allocation4], 1
    %1196 = vsyncpa %s1195, 1
    %1197 = vsyncpa [#allocation6], 1

</llo_original>
